<compile_context>
chip_gen: v5e
topology: v5e:2x2
jax: 0.10.0
libtpu: 0.0.40
codegen_flags: <defaults>
</compile_context>

<pallas_src>
import jax
import jax.numpy as jnp
from jax.experimental import pallas as pl
from jax.experimental.pallas import tpu as pltpu

HIDDEN = 256


def _actor_kernel(x_ref,
                  w1_ref, b1_ref,
                  w2_ref, b2_ref,
                  w3_ref, b3_ref,
                  w4_ref, b4_ref,
                  out_ref):
    cd = w1_ref.dtype  # compute dtype of the matmul operands (f32 or bf16)

    # Layer 1: relu(x @ W1 + b1)   (f32 accumulation on the MXU)
    h = jnp.dot(x_ref[...], w1_ref[...], preferred_element_type=jnp.float32)
    h = jnp.maximum(h + b1_ref[...], 0.0)
    # Layer 2
    h = jnp.dot(h.astype(cd), w2_ref[...], preferred_element_type=jnp.float32)
    h = jnp.maximum(h + b2_ref[...], 0.0)
    # Layer 3
    h = jnp.dot(h.astype(cd), w3_ref[...], preferred_element_type=jnp.float32)
    h = jnp.maximum(h + b3_ref[...], 0.0)
    # Layer 4 (no output activation, matching the PyTorch module)
    a = jnp.dot(h.astype(cd), w4_ref[...], preferred_element_type=jnp.float32)
    out_ref[...] = (a + b4_ref[...]).astype(out_ref.dtype)


def prepare_actor_params(params, compute_dtype=jnp.float32):
    """One-time (init / load time) conversion from PyTorch layout
    (W: [out, in], b: [out]) to kernel layout:
      * W transposed to [in, out], cast to compute_dtype,
      * last-layer W/b zero-padded to a multiple of 128 output lanes,
      * biases kept in f32 as [1, out] rows (added to the f32 accumulator).
    Returns (weight_args_tuple, action_dim)."""
    action_dim = params["w4"].shape[0]
    out_pad = ((action_dim + 127) // 128) * 128

    w1 = params["w1"].T.astype(compute_dtype)            # [state_dim, 256]
    w2 = params["w2"].T.astype(compute_dtype)            # [256, 256]
    w3 = params["w3"].T.astype(compute_dtype)            # [256, 256]
    w4 = params["w4"].T.astype(compute_dtype)            # [256, action_dim]
    w4 = jnp.pad(w4, ((0, 0), (0, out_pad - action_dim)))  # [256, out_pad]

    b1 = params["b1"][None, :].astype(jnp.float32)
    b2 = params["b2"][None, :].astype(jnp.float32)
    b3 = params["b3"][None, :].astype(jnp.float32)
    b4 = jnp.pad(params["b4"], (0, out_pad - action_dim))[None, :].astype(jnp.float32)

    args = (w1, b1, w2, b2, w3, b3, w4, b4)
    # Materialize now so no transpose/pad ops run per forward call.
    args = tuple(jax.block_until_ready(a) for a in args)
    return args, action_dim


def _pick_tile_m(batch):
    if batch >= 256:
        return 256                      # MXU-aligned for v6e/v7x (also a 128-multiple for v5e)
    return max(8, ((batch + 7) // 8) * 8)  # tiny batches: sublane-aligned, single grid step


def actor_forward(x, weight_args, action_dim, tile_m=None):
    """x: [B, state_dim] float32. weight_args: output of prepare_actor_params.
    Returns [B, action_dim] float32."""
    B, state_dim = x.shape
    w1 = weight_args[0]
    compute_dtype = w1.dtype
    out_pad = weight_args[6].shape[1]

    if tile_m is None:
        tile_m = _pick_tile_m(B)
    b_pad = pl.cdiv(B, tile_m) * tile_m

    xk = x.astype(compute_dtype)
    if b_pad != B:
        xk = jnp.pad(xk, ((0, b_pad - B), (0, 0)))

    grid = (b_pad // tile_m,)

    flops = 2 * b_pad * (state_dim * HIDDEN + 2 * HIDDEN * HIDDEN + HIDDEN * out_pad)
    bytes_accessed = (
        xk.size * jnp.dtype(compute_dtype).itemsize
        + sum(int(a.size) * a.dtype.itemsize for a in weight_args)
        + b_pad * out_pad * 4
    )

    out = pl.pallas_call(
        _actor_kernel,
        out_shape=jax.ShapeDtypeStruct((b_pad, out_pad), jnp.float32),
        grid=grid,
        in_specs=[
            pl.BlockSpec((tile_m, state_dim), lambda i: (i, 0)),   # x tile
            pl.BlockSpec((state_dim, HIDDEN), lambda i: (0, 0)),   # W1 (resident)
            pl.BlockSpec((1, HIDDEN),        lambda i: (0, 0)),    # b1
            pl.BlockSpec((HIDDEN, HIDDEN),   lambda i: (0, 0)),    # W2
            pl.BlockSpec((1, HIDDEN),        lambda i: (0, 0)),    # b2
            pl.BlockSpec((HIDDEN, HIDDEN),   lambda i: (0, 0)),    # W3
            pl.BlockSpec((1, HIDDEN),        lambda i: (0, 0)),    # b3
            pl.BlockSpec((HIDDEN, out_pad),  lambda i: (0, 0)),    # W4 (padded)
            pl.BlockSpec((1, out_pad),       lambda i: (0, 0)),    # b4 (padded)
        ],
        out_specs=pl.BlockSpec((tile_m, out_pad), lambda i: (i, 0)),
        compiler_params=pltpu.CompilerParams(
            dimension_semantics=("parallel",)),
        cost_estimate=pl.CostEstimate(
            flops=flops, transcendentals=0, bytes_accessed=bytes_accessed),
    )(xk, *weight_args)

    # Cheap XLA slice back to the logical shape (lane-dense store happened in-kernel).
    return out[:B, :action_dim]


def init_actor_params(key, state_dim, action_dim):
    """Deterministic synthetic init matching nn.Linear shapes (PyTorch layout)."""
    dims = [(state_dim, HIDDEN), (HIDDEN, HIDDEN), (HIDDEN, HIDDEN), (HIDDEN, action_dim)]
    params = {}
    for i, (fan_in, fan_out) in enumerate(dims, start=1):
        key, kw, kb = jax.random.split(key, 3)
        bound = 1.0 / jnp.sqrt(fan_in)
        params[f"w{i}"] = jax.random.uniform(
            kw, (fan_out, fan_in), jnp.float32, minval=-bound, maxval=bound)
        params[f"b{i}"] = jax.random.uniform(
            kb, (fan_out,), jnp.float32, minval=-bound, maxval=bound)
    return params


def actor_reference(x, params):
    """Pure-JAX reference of the PyTorch forward (no output activation)."""
    h = jnp.maximum(x @ params["w1"].T + params["b1"], 0.0)
    h = jnp.maximum(h @ params["w2"].T + params["b2"], 0.0)
    h = jnp.maximum(h @ params["w3"].T + params["b3"], 0.0)
    return h @ params["w4"].T + params["b4"]


if __name__ == "__main__":
    key = jax.random.PRNGKey(0)
    batch, state_dim, action_dim = 8, 32, 8

    key, kx = jax.random.split(key)
    x = jax.random.normal(kx, (batch, state_dim), jnp.float32)
    params = init_actor_params(key, state_dim, action_dim)

    # --- f32 path, tiny batch (single grid step), tight tolerance -----------
    args_f32, adim = prepare_actor_params(params, jnp.float32)
    fwd_f32 = jax.jit(lambda xs: actor_forward(xs, args_f32, adim))
    out = jax.block_until_ready(fwd_f32(x))
    ref = actor_reference(x, params)
    assert out.shape == (batch, action_dim)
    assert jnp.allclose(out, ref, atol=1e-4, rtol=1e-4), "f32 mismatch vs reference"

    # --- bf16-operand path, gridded batch (TILE_M=256, 2 grid steps) --------
    key, kx2 = jax.random.split(key)
    xb = jax.random.normal(kx2, (512, state_dim), jnp.float32)
    args_bf16, _ = prepare_actor_params(params, jnp.bfloat16)
    fwd_bf16 = jax.jit(lambda xs: actor_forward(xs, args_bf16, adim))
    out_b = jax.block_until_ready(fwd_bf16(xb))
    ref_b = actor_reference(xb, params)
    assert out_b.shape == (512, action_dim)
    assert jnp.allclose(out_b, ref_b, atol=5e-2, rtol=5e-2), "bf16 mismatch vs reference"

    print("KERNEL_OK")
</pallas_src>

<mosaic_0001>
module attributes {stable_mosaic.version = 11 : i64} {
  func.func @_actor_kernel(%arg0: i32, %arg1: memref<8x32xf32, #tpu.memory_space<vmem>>, %arg2: memref<32x256xf32, #tpu.memory_space<vmem>>, %arg3: memref<1x256xf32, #tpu.memory_space<vmem>>, %arg4: memref<256x256xf32, #tpu.memory_space<vmem>>, %arg5: memref<1x256xf32, #tpu.memory_space<vmem>>, %arg6: memref<256x256xf32, #tpu.memory_space<vmem>>, %arg7: memref<1x256xf32, #tpu.memory_space<vmem>>, %arg8: memref<256x128xf32, #tpu.memory_space<vmem>>, %arg9: memref<1x128xf32, #tpu.memory_space<vmem>>, %arg10: memref<8x128xf32, #tpu.memory_space<vmem>>) attributes {dimension_semantics = [#tpu.dimension_semantics<parallel>], iteration_bounds = array<i64: 1>, scalar_prefetch = 0 : i64, scratch_operands = 0 : i64, tpu.core_type = #tpu.core_type<tc>, window_params = [{transform_indices = @transform_0, window_bounds = array<i64: 8, 32>}, {pipeline_mode = #tpu.pipeline_mode<synchronous>, transform_indices = @transform_1, window_bounds = array<i64: 32, 256>}, {pipeline_mode = #tpu.pipeline_mode<synchronous>, transform_indices = @transform_2, window_bounds = array<i64: 1, 256>}, {pipeline_mode = #tpu.pipeline_mode<synchronous>, transform_indices = @transform_3, window_bounds = array<i64: 256, 256>}, {pipeline_mode = #tpu.pipeline_mode<synchronous>, transform_indices = @transform_4, window_bounds = array<i64: 1, 256>}, {pipeline_mode = #tpu.pipeline_mode<synchronous>, transform_indices = @transform_5, window_bounds = array<i64: 256, 256>}, {pipeline_mode = #tpu.pipeline_mode<synchronous>, transform_indices = @transform_6, window_bounds = array<i64: 1, 256>}, {pipeline_mode = #tpu.pipeline_mode<synchronous>, transform_indices = @transform_7, window_bounds = array<i64: 256, 128>}, {pipeline_mode = #tpu.pipeline_mode<synchronous>, transform_indices = @transform_8, window_bounds = array<i64: 1, 128>}, {transform_indices = @transform_9, window_bounds = array<i64: 8, 128>}]} {
    %c0 = arith.constant 0 : index
    %c0_0 = arith.constant 0 : index
    %0 = vector.load %arg1[%c0, %c0_0] : memref<8x32xf32, #tpu.memory_space<vmem>>, vector<8x32xf32>
    %c0_1 = arith.constant 0 : index
    %c0_2 = arith.constant 0 : index
    %1 = vector.load %arg2[%c0_1, %c0_2] : memref<32x256xf32, #tpu.memory_space<vmem>>, vector<32x256xf32>
    %cst = arith.constant dense<0.000000e+00> : vector<8x256xf32>
    %2 = tpu.matmul %0, %1, %cst {dimension_numbers = #tpu.dot_dimension_numbers<[1], [0], [0], [1], [0, 0, 1, 1], [], []>} : vector<8x32xf32>, vector<32x256xf32>, vector<8x256xf32> -> vector<8x256xf32>
    %c0_3 = arith.constant 0 : index
    %c0_4 = arith.constant 0 : index
    %3 = vector.load %arg3[%c0_3, %c0_4] : memref<1x256xf32, #tpu.memory_space<vmem>>, vector<1x256xf32>
    %4 = vector.broadcast %3 : vector<1x256xf32> to vector<8x256xf32>
    %5 = arith.addf %2, %4 : vector<8x256xf32>
    %cst_5 = arith.constant 0.000000e+00 : f32
    %6 = vector.broadcast %cst_5 : f32 to vector<8x256xf32>
    %7 = arith.maximumf %5, %6 : vector<8x256xf32>
    %c0_6 = arith.constant 0 : index
    %c0_7 = arith.constant 0 : index
    %8 = vector.load %arg4[%c0_6, %c0_7] : memref<256x256xf32, #tpu.memory_space<vmem>>, vector<256x256xf32>
    %cst_8 = arith.constant dense<0.000000e+00> : vector<8x256xf32>
    %9 = tpu.matmul %7, %8, %cst_8 {dimension_numbers = #tpu.dot_dimension_numbers<[1], [0], [0], [1], [0, 0, 1, 1], [], []>} : vector<8x256xf32>, vector<256x256xf32>, vector<8x256xf32> -> vector<8x256xf32>
    %c0_9 = arith.constant 0 : index
    %c0_10 = arith.constant 0 : index
    %10 = vector.load %arg5[%c0_9, %c0_10] : memref<1x256xf32, #tpu.memory_space<vmem>>, vector<1x256xf32>
    %11 = vector.broadcast %10 : vector<1x256xf32> to vector<8x256xf32>
    %12 = arith.addf %9, %11 : vector<8x256xf32>
    %cst_11 = arith.constant 0.000000e+00 : f32
    %13 = vector.broadcast %cst_11 : f32 to vector<8x256xf32>
    %14 = arith.maximumf %12, %13 : vector<8x256xf32>
    %c0_12 = arith.constant 0 : index
    %c0_13 = arith.constant 0 : index
    %15 = vector.load %arg6[%c0_12, %c0_13] : memref<256x256xf32, #tpu.memory_space<vmem>>, vector<256x256xf32>
    %cst_14 = arith.constant dense<0.000000e+00> : vector<8x256xf32>
    %16 = tpu.matmul %14, %15, %cst_14 {dimension_numbers = #tpu.dot_dimension_numbers<[1], [0], [0], [1], [0, 0, 1, 1], [], []>} : vector<8x256xf32>, vector<256x256xf32>, vector<8x256xf32> -> vector<8x256xf32>
    %c0_15 = arith.constant 0 : index
    %c0_16 = arith.constant 0 : index
    %17 = vector.load %arg7[%c0_15, %c0_16] : memref<1x256xf32, #tpu.memory_space<vmem>>, vector<1x256xf32>
    %18 = vector.broadcast %17 : vector<1x256xf32> to vector<8x256xf32>
    %19 = arith.addf %16, %18 : vector<8x256xf32>
    %cst_17 = arith.constant 0.000000e+00 : f32
    %20 = vector.broadcast %cst_17 : f32 to vector<8x256xf32>
    %21 = arith.maximumf %19, %20 : vector<8x256xf32>
    %c0_18 = arith.constant 0 : index
    %c0_19 = arith.constant 0 : index
    %22 = vector.load %arg8[%c0_18, %c0_19] : memref<256x128xf32, #tpu.memory_space<vmem>>, vector<256x128xf32>
    %cst_20 = arith.constant dense<0.000000e+00> : vector<8x128xf32>
    %23 = tpu.matmul %21, %22, %cst_20 {dimension_numbers = #tpu.dot_dimension_numbers<[1], [0], [0], [1], [0, 0, 1, 1], [], []>} : vector<8x256xf32>, vector<256x128xf32>, vector<8x128xf32> -> vector<8x128xf32>
    %c0_21 = arith.constant 0 : index
    %c0_22 = arith.constant 0 : index
    %24 = vector.load %arg9[%c0_21, %c0_22] : memref<1x128xf32, #tpu.memory_space<vmem>>, vector<1x128xf32>
    %25 = vector.broadcast %24 : vector<1x128xf32> to vector<8x128xf32>
    %26 = arith.addf %23, %25 : vector<8x128xf32>
    %c0_23 = arith.constant 0 : index
    %c0_24 = arith.constant 0 : index
    %27 = vector.load %arg10[%c0_23, %c0_24] : memref<8x128xf32, #tpu.memory_space<vmem>>, vector<8x128xf32>
    tpu.vector_store %arg10[%c0_23, %c0_24], %26 {strides = array<i32>} : memref<8x128xf32, #tpu.memory_space<vmem>>, vector<8x128xf32>,
    return
  }
  func.func @transform_0(%arg0: i32) -> (i32, i32) {
    %c0_i32 = arith.constant 0 : i32
    %c0_i32_0 = arith.constant 0 : i32
    return %arg0, %c0_i32 : i32, i32
  }
  func.func @transform_1(%arg0: i32) -> (i32, i32) {
    %c0_i32 = arith.constant 0 : i32
    %c0_i32_0 = arith.constant 0 : i32
    %c0_i32_1 = arith.constant 0 : i32
    return %c0_i32, %c0_i32_0 : i32, i32
  }
  func.func @transform_2(%arg0: i32) -> (i32, i32) {
    %c0_i32 = arith.constant 0 : i32
    %c0_i32_0 = arith.constant 0 : i32
    %c0_i32_1 = arith.constant 0 : i32
    return %c0_i32, %c0_i32_0 : i32, i32
  }
  func.func @transform_3(%arg0: i32) -> (i32, i32) {
    %c0_i32 = arith.constant 0 : i32
    %c0_i32_0 = arith.constant 0 : i32
    %c0_i32_1 = arith.constant 0 : i32
    return %c0_i32, %c0_i32_0 : i32, i32
  }
  func.func @transform_4(%arg0: i32) -> (i32, i32) {
    %c0_i32 = arith.constant 0 : i32
    %c0_i32_0 = arith.constant 0 : i32
    %c0_i32_1 = arith.constant 0 : i32
    return %c0_i32, %c0_i32_0 : i32, i32
  }
  func.func @transform_5(%arg0: i32) -> (i32, i32) {
    %c0_i32 = arith.constant 0 : i32
    %c0_i32_0 = arith.constant 0 : i32
    %c0_i32_1 = arith.constant 0 : i32
    return %c0_i32, %c0_i32_0 : i32, i32
  }
  func.func @transform_6(%arg0: i32) -> (i32, i32) {
    %c0_i32 = arith.constant 0 : i32
    %c0_i32_0 = arith.constant 0 : i32
    %c0_i32_1 = arith.constant 0 : i32
    return %c0_i32, %c0_i32_0 : i32, i32
  }
  func.func @transform_7(%arg0: i32) -> (i32, i32) {
    %c0_i32 = arith.constant 0 : i32
    %c0_i32_0 = arith.constant 0 : i32
    %c0_i32_1 = arith.constant 0 : i32
    return %c0_i32, %c0_i32_0 : i32, i32
  }
  func.func @transform_8(%arg0: i32) -> (i32, i32) {
    %c0_i32 = arith.constant 0 : i32
    %c0_i32_0 = arith.constant 0 : i32
    %c0_i32_1 = arith.constant 0 : i32
    return %c0_i32, %c0_i32_0 : i32, i32
  }
  func.func @transform_9(%arg0: i32) -> (i32, i32) {
    %c0_i32 = arith.constant 0 : i32
    %c0_i32_0 = arith.constant 0 : i32
    return %arg0, %c0_i32 : i32, i32
  }
}

</mosaic_0001>

<llo_original>
// kernel: _lambda_.1
$region0: #{_lambda_.1}
  #allocation0 [shape = 'u32[]', space=smem, size = 0x4, offset = 0x4, fixed_abs, tag = 'smem constant byte address 0x4 - core index']
  #allocation1 [shape = 'u32[72,128]{1,0:T(1,128)}', space=vmem, size = 0x9000, scoped, tag = 'internal scratch']
  %s0 = inlined_call_operand.hbm [shape: f32[8,32], index: 0, kind: input, shape index: {}]
  %s1 = inlined_call_operand.hbm [shape: f32[32,256], index: 1, kind: input, shape index: {}]
  %s2 = inlined_call_operand.hbm [shape: f32[1,256], index: 2, kind: input, shape index: {}]
  %s3 = inlined_call_operand.hbm [shape: f32[256,256], index: 3, kind: input, shape index: {}]
  %s4 = inlined_call_operand.hbm [shape: f32[1,256], index: 4, kind: input, shape index: {}]
  %s5 = inlined_call_operand.hbm [shape: f32[256,256], index: 5, kind: input, shape index: {}]
  %s6 = inlined_call_operand.vmem [shape: f32[1,256], index: 6, kind: input, shape index: {}]
  %s7 = inlined_call_operand.hbm [shape: f32[256,128], index: 7, kind: input, shape index: {}]
  %s8 = inlined_call_operand.vmem [shape: f32[1,128], index: 8, kind: input, shape index: {}]
  %s9 = inlined_call_operand.hbm [shape: f32[8,128], index: 9, kind: output, shape index: {}]
  %s10 = sld [smem:[#allocation0]]
  $region74: #{_lambda_.1} parent=0
    _
  %s12 = ssub.s32 1, %s10
  %s13 = scalar_select 0, %s12, %s10
  $region1: #{_lambda_.1} parent=0
    #allocation2 [shape = 'u8[4096]{0}', space=vmem, size = 0x1000, scoped, tag = 'input window, operand 0, single buffered']
    #allocation3 [shape = 's32[1]{0}', space=sflag, size = 0x4, scoped, tag = 'scoped memory for _lambda_.1']
    #allocation4 [shape = 's32[1]{0}', space=sflag, size = 0x4, scoped, tag = 'scoped memory for _lambda_.1']
    #allocation5 [shape = 'u8[32768]{0}', space=vmem, size = 0x8000, scoped, tag = 'input window, operand 1, single buffered']
    #allocation6 [shape = 's32[1]{0}', space=sflag, size = 0x4, scoped, tag = 'scoped memory for _lambda_.1']
    #allocation7 [shape = 'u8[1024]{0}', space=vmem, size = 0x400, scoped, tag = 'input window, operand 2, single buffered']
    #allocation8 [shape = 'u8[262144]{0}', space=vmem, size = 0x40000, scoped, tag = 'input window, operand 3, single buffered']
    #allocation9 [shape = 's32[1]{0}', space=sflag, size = 0x4, scoped, tag = 'scoped memory for _lambda_.1']
    #allocation10 [shape = 'u8[1024]{0}', space=vmem, size = 0x400, scoped, tag = 'input window, operand 4, single buffered']
    #allocation11 [shape = 'u8[262144]{0}', space=vmem, size = 0x40000, scoped, tag = 'input window, operand 5, single buffered']
    #allocation12 [shape = 's32[1]{0}', space=sflag, size = 0x4, scoped, tag = 'scoped memory for _lambda_.1']
    #allocation13 [shape = 'u8[131072]{0}', space=vmem, size = 0x20000, scoped, tag = 'input window, operand 7, single buffered']
    #allocation14 [shape = 'u8[4096]{0}', space=vmem, size = 0x1000, scoped, tag = 'output window, operand 0, single buffered']
    %14 = vsyncpa [#allocation3], 0
    %15 = vsyncpa [#allocation6], 0
    %16 = vsyncpa [#allocation9], 0
    %17 = vsyncpa [#allocation12], 0
    %18 = vsyncpa [#allocation4], 0
    // Predicated region
    $region2: #{_lambda_.1} parent=1 // pred_check
      _
    $region3: #{_lambda_.1} parent=1 // pred_check_branch
      %20 = sbr.rel (0) target = $region5
    $region4: #{_lambda_.1} parent=1 // pred_region
      %22 = vsyncadd [#allocation3], 0
      %s24 = sshll.u32 %s0, 4
      %s25 = int_to_ptr.hbm [resolvable:$true] %s24
      %s26 = sshll.u32 [#allocation2], 4
      %s27 = int_to_ptr.vmem [resolvable:$true] %s26
      %29 = dma.hbm_to_vmem [thread:$0]  %s25, 128, %s27, [#allocation3]
    $region5: #{_lambda_.1} parent=1 // pred_fallthru
      _
    // Predicated region
    $region6: #{_lambda_.1} parent=1 // pred_check
      _
    $region7: #{_lambda_.1} parent=1 // pred_check_branch
      %31 = sbr.rel (0) target = $region9
    $region8: #{_lambda_.1} parent=1 // pred_region
      %33 = vsyncadd [#allocation6], 0
      %s34 = sshll.u32 %s1, 4
      %s35 = int_to_ptr.hbm [resolvable:$true] %s34
      %s36 = sshll.u32 [#allocation5], 4
      %s37 = int_to_ptr.vmem [resolvable:$true] %s36
      %42 = dma.hbm_to_vmem [thread:$0]  %s35, 1024, %s37, [#allocation6], 256, 256, 16
    $region9: #{_lambda_.1} parent=1 // pred_fallthru
      _
    // Predicated region
    $region10: #{_lambda_.1} parent=1 // pred_check
      _
    $region11: #{_lambda_.1} parent=1 // pred_check_branch
      %44 = sbr.rel (0) target = $region13
    $region12: #{_lambda_.1} parent=1 // pred_region
      %46 = vsyncadd [#allocation6], 0
      %s48 = sshll.u32 %s2, 4
      %s49 = int_to_ptr.hbm [resolvable:$true] %s48
      %s50 = sshll.u32 [#allocation7], 4
      %s51 = int_to_ptr.vmem [resolvable:$true] %s50
      %53 = dma.hbm_to_vmem [thread:$0]  %s49, 32, %s51, [#allocation6]
    $region13: #{_lambda_.1} parent=1 // pred_fallthru
      _
    // Predicated region
    $region14: #{_lambda_.1} parent=1 // pred_check
      _
    $region15: #{_lambda_.1} parent=1 // pred_check_branch
      %55 = sbr.rel (0) target = $region17
    $region16: #{_lambda_.1} parent=1 // pred_region
      %57 = vsyncadd [#allocation9], 0
      %s58 = sshll.u32 %s3, 4
      %s59 = int_to_ptr.hbm [resolvable:$true] %s58
      %s60 = sshll.u32 [#allocation8], 4
      %s61 = int_to_ptr.vmem [resolvable:$true] %s60
      %66 = dma.hbm_to_vmem [thread:$0]  %s59, 8192, %s61, [#allocation9], 256, 256, 16
    $region17: #{_lambda_.1} parent=1 // pred_fallthru
      _
    // Predicated region
    $region18: #{_lambda_.1} parent=1 // pred_check
      _
    $region19: #{_lambda_.1} parent=1 // pred_check_branch
      %68 = sbr.rel (0) target = $region21
    $region20: #{_lambda_.1} parent=1 // pred_region
      %70 = vsyncadd [#allocation9], 0
      %s72 = sshll.u32 %s4, 4
      %s73 = int_to_ptr.hbm [resolvable:$true] %s72
      %s74 = sshll.u32 [#allocation10], 4
      %s75 = int_to_ptr.vmem [resolvable:$true] %s74
      %77 = dma.hbm_to_vmem [thread:$0]  %s73, 32, %s75, [#allocation9]
    $region21: #{_lambda_.1} parent=1 // pred_fallthru
      _
    // Predicated region
    $region22: #{_lambda_.1} parent=1 // pred_check
      _
    $region23: #{_lambda_.1} parent=1 // pred_check_branch
      %79 = sbr.rel (0) target = $region25
    $region24: #{_lambda_.1} parent=1 // pred_region
      %81 = vsyncadd [#allocation12], 0
      %s82 = sshll.u32 %s5, 4
      %s83 = int_to_ptr.hbm [resolvable:$true] %s82
      %s84 = sshll.u32 [#allocation11], 4
      %s85 = int_to_ptr.vmem [resolvable:$true] %s84
      %90 = dma.hbm_to_vmem [thread:$0]  %s83, 8192, %s85, [#allocation12], 256, 256, 16
    $region25: #{_lambda_.1} parent=1 // pred_fallthru
      _
    // Predicated region
    $region26: #{_lambda_.1} parent=1 // pred_check
      _
    $region27: #{_lambda_.1} parent=1 // pred_check_branch
      %92 = sbr.rel (0) target = $region29
    $region28: #{_lambda_.1} parent=1 // pred_region
      _
    $region29: #{_lambda_.1} parent=1 // pred_fallthru
      _
    // Predicated region
    $region30: #{_lambda_.1} parent=1 // pred_check
      _
    $region31: #{_lambda_.1} parent=1 // pred_check_branch
      %94 = sbr.rel (0) target = $region33
    $region32: #{_lambda_.1} parent=1 // pred_region
      %96 = vsyncadd [#allocation12], 0
      %s97 = sshll.u32 %s7, 4
      %s98 = int_to_ptr.hbm [resolvable:$true] %s97
      %s99 = sshll.u32 [#allocation13], 4
      %s100 = int_to_ptr.vmem [resolvable:$true] %s99
      %105 = dma.hbm_to_vmem [thread:$0]  %s98, 4096, %s100, [#allocation12], 128, 128, 8
    $region33: #{_lambda_.1} parent=1 // pred_fallthru
      _
    // Predicated region
    $region34: #{_lambda_.1} parent=1 // pred_check
      _
    $region35: #{_lambda_.1} parent=1 // pred_check_branch
      %107 = sbr.rel (0) target = $region37
    $region36: #{_lambda_.1} parent=1 // pred_region
      _
    $region37: #{_lambda_.1} parent=1 // pred_fallthru
      _
    // Predicated region
    $region38: #{_lambda_.1} parent=1 // pred_check
      _
    $region39: #{_lambda_.1} parent=1 // pred_check_branch
      %109 = sbr.rel (0) target = $region41
    $region40: #{_lambda_.1} parent=1 // pred_region
      %111 = dma.done [#allocation3], 128
    $region41: #{_lambda_.1} parent=1 // pred_fallthru
      _
    // Predicated region
    $region42: #{_lambda_.1} parent=1 // pred_check
      _
    $region43: #{_lambda_.1} parent=1 // pred_check_branch
      %113 = sbr.rel (0) target = $region45
    $region44: #{_lambda_.1} parent=1 // pred_region
      %115 = dma.done [#allocation6], 1024
    $region45: #{_lambda_.1} parent=1 // pred_fallthru
      _
    // Predicated region
    $region46: #{_lambda_.1} parent=1 // pred_check
      _
    $region47: #{_lambda_.1} parent=1 // pred_check_branch
      %117 = sbr.rel (0) target = $region49
    $region48: #{_lambda_.1} parent=1 // pred_region
      %119 = dma.done [#allocation6], 32
    $region49: #{_lambda_.1} parent=1 // pred_fallthru
      _
    // Predicated region
    $region50: #{_lambda_.1} parent=1 // pred_check
      _
    $region51: #{_lambda_.1} parent=1 // pred_check_branch
      %121 = sbr.rel (0) target = $region53
    $region52: #{_lambda_.1} parent=1 // pred_region
      %123 = dma.done [#allocation9], 8192
    $region53: #{_lambda_.1} parent=1 // pred_fallthru
      _
    // Predicated region
    $region54: #{_lambda_.1} parent=1 // pred_check
      _
    $region55: #{_lambda_.1} parent=1 // pred_check_branch
      %125 = sbr.rel (0) target = $region57
    $region56: #{_lambda_.1} parent=1 // pred_region
      %127 = dma.done [#allocation9], 32
    $region57: #{_lambda_.1} parent=1 // pred_fallthru
      _
    // Predicated region
    $region58: #{_lambda_.1} parent=1 // pred_check
      _
    $region59: #{_lambda_.1} parent=1 // pred_check_branch
      %129 = sbr.rel (0) target = $region61
    $region60: #{_lambda_.1} parent=1 // pred_region
      %131 = dma.done [#allocation12], 8192
    $region61: #{_lambda_.1} parent=1 // pred_fallthru
      _
    // Predicated region
    $region62: #{_lambda_.1} parent=1 // pred_check
      _
    $region63: #{_lambda_.1} parent=1 // pred_check_branch
      %133 = sbr.rel (0) target = $region65
    $region64: #{_lambda_.1} parent=1 // pred_region
      %135 = dma.done [#allocation12], 4096
    $region65: #{_lambda_.1} parent=1 // pred_fallthru
      _
    %v136 = vld [vmem:[#allocation2] sm:$0xff]
    %v137 = vld [vmem:[#allocation5] sm:$0xff]
    %v138 = vld [vmem:[#allocation5 + $0x8] sm:$0xff]
    %v139 = vld [vmem:[#allocation5 + $0x10] sm:$0xff]
    %v140 = vld [vmem:[#allocation5 + $0x18] sm:$0xff]
    %v141 = vld [vmem:[#allocation5 + $0x20] sm:$0xff]
    %v142 = vld [vmem:[#allocation5 + $0x28] sm:$0xff]
    %v143 = vld [vmem:[#allocation5 + $0x30] sm:$0xff]
    %v144 = vld [vmem:[#allocation5 + $0x38] sm:$0xff]
    %v145 = vld [vmem:[#allocation7] sm:$0x3]
    %v147 = vperm.slane %v145, 0
    %v148 = vperm.slane %v145, 1
    %vm151 = vcmask 261120
    %v153 = vsel %vm151, %v136, 0
    %155 = vmatpush.msra.mxu0 0.0
    %156 = vmatpush.msra.mxu0 0.0
    %157 = vmatpush.msra.mxu0 0.0
    %158 = vmatpush.msra.mxu0 0.0
    %159 = vmatpush.msra.mxu0 0.0
    %160 = vmatpush.msra.mxu0 0.0
    %161 = vmatpush.msra.mxu0 0.0
    %162 = vmatpush.msra.mxu0 0.0
    %163 = vmatpush.msra.mxu0 0.0
    %164 = vmatpush.msra.mxu0 0.0
    %165 = vmatpush.msra.mxu0 0.0
    %166 = vmatpush.msra.mxu0 0.0
    %167 = vmatpush.msra.mxu0 %v143
    %168 = vmatpush.msra.mxu0 %v141
    %169 = vmatpush.msra.mxu0 %v139
    %170 = vmatpush.msra.mxu0 %v137
    %171 = vmatmul.f32.gmra.mxu0 %v153
    %v172 = vpop.f32.mrf.mxu0
    %v173 = vadd.f32 %v147, %v172
    %174 = vdwg.mxu0
    %175 = vmatpush.msra.mxu0 0.0
    %176 = vmatpush.msra.mxu0 0.0
    %177 = vmatpush.msra.mxu0 0.0
    %178 = vmatpush.msra.mxu0 0.0
    %179 = vmatpush.msra.mxu0 0.0
    %180 = vmatpush.msra.mxu0 0.0
    %181 = vmatpush.msra.mxu0 0.0
    %182 = vmatpush.msra.mxu0 0.0
    %183 = vmatpush.msra.mxu0 0.0
    %184 = vmatpush.msra.mxu0 0.0
    %185 = vmatpush.msra.mxu0 0.0
    %186 = vmatpush.msra.mxu0 0.0
    %187 = vmatpush.msra.mxu0 %v144
    %188 = vmatpush.msra.mxu0 %v142
    %189 = vmatpush.msra.mxu0 %v140
    %190 = vmatpush.msra.mxu0 %v138
    %191 = vmatmul.f32.gmra.mxu0 %v153
    %v192 = vpop.f32.mrf.mxu0
    %v193 = vadd.f32 %v148, %v192
    %194 = vdwg.mxu0
    %v195 = vmax.f32 %v173, 0.0
    %v196 = vmax.f32 %v193, 0.0
    %v197 = vld [vmem:[#allocation8] sm:$0xff]
    %v198 = vld [vmem:[#allocation8 + $0x8] sm:$0xff]
    %v199 = vld [vmem:[#allocation8 + $0x10] sm:$0xff]
    %v200 = vld [vmem:[#allocation8 + $0x18] sm:$0xff]
    %v201 = vld [vmem:[#allocation8 + $0x20] sm:$0xff]
    %v202 = vld [vmem:[#allocation8 + $0x28] sm:$0xff]
    %v203 = vld [vmem:[#allocation8 + $0x30] sm:$0xff]
    %v204 = vld [vmem:[#allocation8 + $0x38] sm:$0xff]
    %v205 = vld [vmem:[#allocation8 + $0x40] sm:$0xff]
    %v206 = vld [vmem:[#allocation8 + $0x48] sm:$0xff]
    %v207 = vld [vmem:[#allocation8 + $0x50] sm:$0xff]
    %v208 = vld [vmem:[#allocation8 + $0x58] sm:$0xff]
    %v209 = vld [vmem:[#allocation8 + $0x60] sm:$0xff]
    %v210 = vld [vmem:[#allocation8 + $0x68] sm:$0xff]
    %v211 = vld [vmem:[#allocation8 + $0x70] sm:$0xff]
    %v212 = vld [vmem:[#allocation8 + $0x78] sm:$0xff]
    %v213 = vld [vmem:[#allocation8 + $0x80] sm:$0xff]
    %v214 = vld [vmem:[#allocation8 + $0x88] sm:$0xff]
    %v215 = vld [vmem:[#allocation8 + $0x90] sm:$0xff]
    %v216 = vld [vmem:[#allocation8 + $0x98] sm:$0xff]
    %v217 = vld [vmem:[#allocation8 + $0xa0] sm:$0xff]
    %v218 = vld [vmem:[#allocation8 + $0xa8] sm:$0xff]
    %v219 = vld [vmem:[#allocation8 + $0xb0] sm:$0xff]
    %v220 = vld [vmem:[#allocation8 + $0xb8] sm:$0xff]
    %v221 = vld [vmem:[#allocation8 + $0xc0] sm:$0xff]
    %v222 = vld [vmem:[#allocation8 + $0xc8] sm:$0xff]
    %v223 = vld [vmem:[#allocation8 + $0xd0] sm:$0xff]
    %v224 = vld [vmem:[#allocation8 + $0xd8] sm:$0xff]
    %v225 = vld [vmem:[#allocation8 + $0xe0] sm:$0xff]
    %v226 = vld [vmem:[#allocation8 + $0xe8] sm:$0xff]
    %v227 = vld [vmem:[#allocation8 + $0xf0] sm:$0xff]
    %v228 = vld [vmem:[#allocation8 + $0xf8] sm:$0xff]
    %v229 = vld [vmem:[#allocation8 + $0x100] sm:$0xff]
    %v230 = vld [vmem:[#allocation8 + $0x108] sm:$0xff]
    %v231 = vld [vmem:[#allocation8 + $0x110] sm:$0xff]
    %v232 = vld [vmem:[#allocation8 + $0x118] sm:$0xff]
    %v233 = vld [vmem:[#allocation8 + $0x120] sm:$0xff]
    %v234 = vld [vmem:[#allocation8 + $0x128] sm:$0xff]
    %v235 = vld [vmem:[#allocation8 + $0x130] sm:$0xff]
    %v236 = vld [vmem:[#allocation8 + $0x138] sm:$0xff]
    %v237 = vld [vmem:[#allocation8 + $0x140] sm:$0xff]
    %v238 = vld [vmem:[#allocation8 + $0x148] sm:$0xff]
    %v239 = vld [vmem:[#allocation8 + $0x150] sm:$0xff]
    %v240 = vld [vmem:[#allocation8 + $0x158] sm:$0xff]
    %v241 = vld [vmem:[#allocation8 + $0x160] sm:$0xff]
    %v242 = vld [vmem:[#allocation8 + $0x168] sm:$0xff]
    %v243 = vld [vmem:[#allocation8 + $0x170] sm:$0xff]
    %v244 = vld [vmem:[#allocation8 + $0x178] sm:$0xff]
    %v245 = vld [vmem:[#allocation8 + $0x180] sm:$0xff]
    %v246 = vld [vmem:[#allocation8 + $0x188] sm:$0xff]
    %v247 = vld [vmem:[#allocation8 + $0x190] sm:$0xff]
    %v248 = vld [vmem:[#allocation8 + $0x198] sm:$0xff]
    %v249 = vld [vmem:[#allocation8 + $0x1a0] sm:$0xff]
    %v250 = vld [vmem:[#allocation8 + $0x1a8] sm:$0xff]
    %v251 = vld [vmem:[#allocation8 + $0x1b0] sm:$0xff]
    %v252 = vld [vmem:[#allocation8 + $0x1b8] sm:$0xff]
    %v253 = vld [vmem:[#allocation8 + $0x1c0] sm:$0xff]
    %v254 = vld [vmem:[#allocation8 + $0x1c8] sm:$0xff]
    %v255 = vld [vmem:[#allocation8 + $0x1d0] sm:$0xff]
    %v256 = vld [vmem:[#allocation8 + $0x1d8] sm:$0xff]
    %v257 = vld [vmem:[#allocation8 + $0x1e0] sm:$0xff]
    %v258 = vld [vmem:[#allocation8 + $0x1e8] sm:$0xff]
    %v259 = vld [vmem:[#allocation8 + $0x1f0] sm:$0xff]
    %v260 = vld [vmem:[#allocation8 + $0x1f8] sm:$0xff]
    %v261 = vld [vmem:[#allocation10] sm:$0x3]
    %v263 = vperm.slane %v261, 0
    %v264 = vperm.slane %v261, 1
    %267 = vmatpush.msra.mxu0 %v227
    %268 = vmatpush.msra.mxu0 %v225
    %269 = vmatpush.msra.mxu0 %v223
    %270 = vmatpush.msra.mxu0 %v221
    %271 = vmatpush.msra.mxu0 %v219
    %272 = vmatpush.msra.mxu0 %v217
    %273 = vmatpush.msra.mxu0 %v215
    %274 = vmatpush.msra.mxu0 %v213
    %275 = vmatpush.msra.mxu0 %v211
    %276 = vmatpush.msra.mxu0 %v209
    %277 = vmatpush.msra.mxu0 %v207
    %278 = vmatpush.msra.mxu0 %v205
    %279 = vmatpush.msra.mxu0 %v203
    %280 = vmatpush.msra.mxu0 %v201
    %281 = vmatpush.msra.mxu0 %v199
    %282 = vmatpush.msra.mxu0 %v197
    %283 = vmatmul.f32.gmra.mxu0 %v195
    %v284 = vpop.f32.mrf.mxu0
    %v285 = vadd.f32 %v263, %v284
    %286 = vdwg.mxu0
    %287 = vmatpush.msra.mxu0 %v259
    %288 = vmatpush.msra.mxu0 %v257
    %289 = vmatpush.msra.mxu0 %v255
    %290 = vmatpush.msra.mxu0 %v253
    %291 = vmatpush.msra.mxu0 %v251
    %292 = vmatpush.msra.mxu0 %v249
    %293 = vmatpush.msra.mxu0 %v247
    %294 = vmatpush.msra.mxu0 %v245
    %295 = vmatpush.msra.mxu0 %v243
    %296 = vmatpush.msra.mxu0 %v241
    %297 = vmatpush.msra.mxu0 %v239
    %298 = vmatpush.msra.mxu0 %v237
    %299 = vmatpush.msra.mxu0 %v235
    %300 = vmatpush.msra.mxu0 %v233
    %301 = vmatpush.msra.mxu0 %v231
    %302 = vmatpush.msra.mxu0 %v229
    %303 = vmatmul.f32.gmra.mxu0 %v196
    %v304 = vpop.f32.mrf.mxu0
    %v305 = vadd.f32 %v285, %v304
    %306 = vdwg.mxu0
    %307 = vmatpush.msra.mxu0 %v228
    %308 = vmatpush.msra.mxu0 %v226
    %309 = vmatpush.msra.mxu0 %v224
    %310 = vmatpush.msra.mxu0 %v222
    %311 = vmatpush.msra.mxu0 %v220
    %312 = vmatpush.msra.mxu0 %v218
    %313 = vmatpush.msra.mxu0 %v216
    %314 = vmatpush.msra.mxu0 %v214
    %315 = vmatpush.msra.mxu0 %v212
    %316 = vmatpush.msra.mxu0 %v210
    %317 = vmatpush.msra.mxu0 %v208
    %318 = vmatpush.msra.mxu0 %v206
    %319 = vmatpush.msra.mxu0 %v204
    %320 = vmatpush.msra.mxu0 %v202
    %321 = vmatpush.msra.mxu0 %v200
    %322 = vmatpush.msra.mxu0 %v198
    %323 = vmatmul.f32.gmra.mxu0 %v195
    %v324 = vpop.f32.mrf.mxu0
    %v325 = vadd.f32 %v264, %v324
    %326 = vdwg.mxu0
    %327 = vmatpush.msra.mxu0 %v260
    %328 = vmatpush.msra.mxu0 %v258
    %329 = vmatpush.msra.mxu0 %v256
    %330 = vmatpush.msra.mxu0 %v254
    %331 = vmatpush.msra.mxu0 %v252
    %332 = vmatpush.msra.mxu0 %v250
    %333 = vmatpush.msra.mxu0 %v248
    %334 = vmatpush.msra.mxu0 %v246
    %335 = vmatpush.msra.mxu0 %v244
    %336 = vmatpush.msra.mxu0 %v242
    %337 = vmatpush.msra.mxu0 %v240
    %338 = vmatpush.msra.mxu0 %v238
    %339 = vmatpush.msra.mxu0 %v236
    %340 = vmatpush.msra.mxu0 %v234
    %341 = vmatpush.msra.mxu0 %v232
    %342 = vmatpush.msra.mxu0 %v230
    %343 = vmatmul.f32.gmra.mxu0 %v196
    %v344 = vpop.f32.mrf.mxu0
    %v345 = vadd.f32 %v325, %v344
    %346 = vdwg.mxu0
    %v347 = vmax.f32 %v305, 0.0
    %v348 = vmax.f32 %v345, 0.0
    %v349 = vld [vmem:[#allocation11] sm:$0xff]
    %v350 = vld [vmem:[#allocation11 + $0x8] sm:$0xff]
    %v351 = vld [vmem:[#allocation11 + $0x10] sm:$0xff]
    %v352 = vld [vmem:[#allocation11 + $0x18] sm:$0xff]
    %v353 = vld [vmem:[#allocation11 + $0x20] sm:$0xff]
    %v354 = vld [vmem:[#allocation11 + $0x28] sm:$0xff]
    %v355 = vld [vmem:[#allocation11 + $0x30] sm:$0xff]
    %v356 = vld [vmem:[#allocation11 + $0x38] sm:$0xff]
    %v357 = vld [vmem:[#allocation11 + $0x40] sm:$0xff]
    %v358 = vld [vmem:[#allocation11 + $0x48] sm:$0xff]
    %v359 = vld [vmem:[#allocation11 + $0x50] sm:$0xff]
    %v360 = vld [vmem:[#allocation11 + $0x58] sm:$0xff]
    %v361 = vld [vmem:[#allocation11 + $0x60] sm:$0xff]
    %v362 = vld [vmem:[#allocation11 + $0x68] sm:$0xff]
    %v363 = vld [vmem:[#allocation11 + $0x70] sm:$0xff]
    %v364 = vld [vmem:[#allocation11 + $0x78] sm:$0xff]
    %v365 = vld [vmem:[#allocation11 + $0x80] sm:$0xff]
    %v366 = vld [vmem:[#allocation11 + $0x88] sm:$0xff]
    %v367 = vld [vmem:[#allocation11 + $0x90] sm:$0xff]
    %v368 = vld [vmem:[#allocation11 + $0x98] sm:$0xff]
    %v369 = vld [vmem:[#allocation11 + $0xa0] sm:$0xff]
    %v370 = vld [vmem:[#allocation11 + $0xa8] sm:$0xff]
    %v371 = vld [vmem:[#allocation11 + $0xb0] sm:$0xff]
    %v372 = vld [vmem:[#allocation11 + $0xb8] sm:$0xff]
    %v373 = vld [vmem:[#allocation11 + $0xc0] sm:$0xff]
    %v374 = vld [vmem:[#allocation11 + $0xc8] sm:$0xff]
    %v375 = vld [vmem:[#allocation11 + $0xd0] sm:$0xff]
    %v376 = vld [vmem:[#allocation11 + $0xd8] sm:$0xff]
    %v377 = vld [vmem:[#allocation11 + $0xe0] sm:$0xff]
    %v378 = vld [vmem:[#allocation11 + $0xe8] sm:$0xff]
    %v379 = vld [vmem:[#allocation11 + $0xf0] sm:$0xff]
    %v380 = vld [vmem:[#allocation11 + $0xf8] sm:$0xff]
    %v381 = vld [vmem:[#allocation11 + $0x100] sm:$0xff]
    %v382 = vld [vmem:[#allocation11 + $0x108] sm:$0xff]
    %v383 = vld [vmem:[#allocation11 + $0x110] sm:$0xff]
    %v384 = vld [vmem:[#allocation11 + $0x118] sm:$0xff]
    %v385 = vld [vmem:[#allocation11 + $0x120] sm:$0xff]
    %v386 = vld [vmem:[#allocation11 + $0x128] sm:$0xff]
    %v387 = vld [vmem:[#allocation11 + $0x130] sm:$0xff]
    %v388 = vld [vmem:[#allocation11 + $0x138] sm:$0xff]
    %v389 = vld [vmem:[#allocation11 + $0x140] sm:$0xff]
    %v390 = vld [vmem:[#allocation11 + $0x148] sm:$0xff]
    %v391 = vld [vmem:[#allocation11 + $0x150] sm:$0xff]
    %v392 = vld [vmem:[#allocation11 + $0x158] sm:$0xff]
    %v393 = vld [vmem:[#allocation11 + $0x160] sm:$0xff]
    %v394 = vld [vmem:[#allocation11 + $0x168] sm:$0xff]
    %v395 = vld [vmem:[#allocation11 + $0x170] sm:$0xff]
    %v396 = vld [vmem:[#allocation11 + $0x178] sm:$0xff]
    %v397 = vld [vmem:[#allocation11 + $0x180] sm:$0xff]
    %v398 = vld [vmem:[#allocation11 + $0x188] sm:$0xff]
    %v399 = vld [vmem:[#allocation11 + $0x190] sm:$0xff]
    %v400 = vld [vmem:[#allocation11 + $0x198] sm:$0xff]
    %v401 = vld [vmem:[#allocation11 + $0x1a0] sm:$0xff]
    %v402 = vld [vmem:[#allocation11 + $0x1a8] sm:$0xff]
    %v403 = vld [vmem:[#allocation11 + $0x1b0] sm:$0xff]
    %v404 = vld [vmem:[#allocation11 + $0x1b8] sm:$0xff]
    %v405 = vld [vmem:[#allocation11 + $0x1c0] sm:$0xff]
    %v406 = vld [vmem:[#allocation11 + $0x1c8] sm:$0xff]
    %v407 = vld [vmem:[#allocation11 + $0x1d0] sm:$0xff]
    %v408 = vld [vmem:[#allocation11 + $0x1d8] sm:$0xff]
    %v409 = vld [vmem:[#allocation11 + $0x1e0] sm:$0xff]
    %v410 = vld [vmem:[#allocation11 + $0x1e8] sm:$0xff]
    %v411 = vld [vmem:[#allocation11 + $0x1f0] sm:$0xff]
    %v412 = vld [vmem:[#allocation11 + $0x1f8] sm:$0xff]
    %v413 = vld [vmem:[%s6] sm:$0x3]
    %v415 = vperm.slane %v413, 0
    %v416 = vperm.slane %v413, 1
    %419 = vmatpush.msra.mxu0 %v379
    %420 = vmatpush.msra.mxu0 %v377
    %421 = vmatpush.msra.mxu0 %v375
    %422 = vmatpush.msra.mxu0 %v373
    %423 = vmatpush.msra.mxu0 %v371
    %424 = vmatpush.msra.mxu0 %v369
    %425 = vmatpush.msra.mxu0 %v367
    %426 = vmatpush.msra.mxu0 %v365
    %427 = vmatpush.msra.mxu0 %v363
    %428 = vmatpush.msra.mxu0 %v361
    %429 = vmatpush.msra.mxu0 %v359
    %430 = vmatpush.msra.mxu0 %v357
    %431 = vmatpush.msra.mxu0 %v355
    %432 = vmatpush.msra.mxu0 %v353
    %433 = vmatpush.msra.mxu0 %v351
    %434 = vmatpush.msra.mxu0 %v349
    %435 = vmatmul.f32.gmra.mxu0 %v347
    %v436 = vpop.f32.mrf.mxu0
    %v437 = vadd.f32 %v415, %v436
    %438 = vdwg.mxu0
    %439 = vmatpush.msra.mxu0 %v411
    %440 = vmatpush.msra.mxu0 %v409
    %441 = vmatpush.msra.mxu0 %v407
    %442 = vmatpush.msra.mxu0 %v405
    %443 = vmatpush.msra.mxu0 %v403
    %444 = vmatpush.msra.mxu0 %v401
    %445 = vmatpush.msra.mxu0 %v399
    %446 = vmatpush.msra.mxu0 %v397
    %447 = vmatpush.msra.mxu0 %v395
    %448 = vmatpush.msra.mxu0 %v393
    %449 = vmatpush.msra.mxu0 %v391
    %450 = vmatpush.msra.mxu0 %v389
    %451 = vmatpush.msra.mxu0 %v387
    %452 = vmatpush.msra.mxu0 %v385
    %453 = vmatpush.msra.mxu0 %v383
    %454 = vmatpush.msra.mxu0 %v381
    %455 = vmatmul.f32.gmra.mxu0 %v348
    %v456 = vpop.f32.mrf.mxu0
    %v457 = vadd.f32 %v437, %v456
    %458 = vdwg.mxu0
    %459 = vmatpush.msra.mxu0 %v380
    %460 = vmatpush.msra.mxu0 %v378
    %461 = vmatpush.msra.mxu0 %v376
    %462 = vmatpush.msra.mxu0 %v374
    %463 = vmatpush.msra.mxu0 %v372
    %464 = vmatpush.msra.mxu0 %v370
    %465 = vmatpush.msra.mxu0 %v368
    %466 = vmatpush.msra.mxu0 %v366
    %467 = vmatpush.msra.mxu0 %v364
    %468 = vmatpush.msra.mxu0 %v362
    %469 = vmatpush.msra.mxu0 %v360
    %470 = vmatpush.msra.mxu0 %v358
    %471 = vmatpush.msra.mxu0 %v356
    %472 = vmatpush.msra.mxu0 %v354
    %473 = vmatpush.msra.mxu0 %v352
    %474 = vmatpush.msra.mxu0 %v350
    %475 = vmatmul.f32.gmra.mxu0 %v347
    %v476 = vpop.f32.mrf.mxu0
    %v477 = vadd.f32 %v416, %v476
    %478 = vdwg.mxu0
    %479 = vmatpush.msra.mxu0 %v412
    %480 = vmatpush.msra.mxu0 %v410
    %481 = vmatpush.msra.mxu0 %v408
    %482 = vmatpush.msra.mxu0 %v406
    %483 = vmatpush.msra.mxu0 %v404
    %484 = vmatpush.msra.mxu0 %v402
    %485 = vmatpush.msra.mxu0 %v400
    %486 = vmatpush.msra.mxu0 %v398
    %487 = vmatpush.msra.mxu0 %v396
    %488 = vmatpush.msra.mxu0 %v394
    %489 = vmatpush.msra.mxu0 %v392
    %490 = vmatpush.msra.mxu0 %v390
    %491 = vmatpush.msra.mxu0 %v388
    %492 = vmatpush.msra.mxu0 %v386
    %493 = vmatpush.msra.mxu0 %v384
    %494 = vmatpush.msra.mxu0 %v382
    %495 = vmatmul.f32.gmra.mxu0 %v348
    %v496 = vpop.f32.mrf.mxu0
    %v497 = vadd.f32 %v477, %v496
    %498 = vdwg.mxu0
    %v499 = vmax.f32 %v457, 0.0
    %v500 = vmax.f32 %v497, 0.0
    %v501 = vld [vmem:[#allocation13] sm:$0xff]
    %v502 = vld [vmem:[#allocation13 + $0x8] sm:$0xff]
    %v503 = vld [vmem:[#allocation13 + $0x10] sm:$0xff]
    %v504 = vld [vmem:[#allocation13 + $0x18] sm:$0xff]
    %v505 = vld [vmem:[#allocation13 + $0x20] sm:$0xff]
    %v506 = vld [vmem:[#allocation13 + $0x28] sm:$0xff]
    %v507 = vld [vmem:[#allocation13 + $0x30] sm:$0xff]
    %v508 = vld [vmem:[#allocation13 + $0x38] sm:$0xff]
    %v509 = vld [vmem:[#allocation13 + $0x40] sm:$0xff]
    %v510 = vld [vmem:[#allocation13 + $0x48] sm:$0xff]
    %v511 = vld [vmem:[#allocation13 + $0x50] sm:$0xff]
    %v512 = vld [vmem:[#allocation13 + $0x58] sm:$0xff]
    %v513 = vld [vmem:[#allocation13 + $0x60] sm:$0xff]
    %v514 = vld [vmem:[#allocation13 + $0x68] sm:$0xff]
    %v515 = vld [vmem:[#allocation13 + $0x70] sm:$0xff]
    %v516 = vld [vmem:[#allocation13 + $0x78] sm:$0xff]
    %v517 = vld [vmem:[#allocation13 + $0x80] sm:$0xff]
    %v518 = vld [vmem:[#allocation13 + $0x88] sm:$0xff]
    %v519 = vld [vmem:[#allocation13 + $0x90] sm:$0xff]
    %v520 = vld [vmem:[#allocation13 + $0x98] sm:$0xff]
    %v521 = vld [vmem:[#allocation13 + $0xa0] sm:$0xff]
    %v522 = vld [vmem:[#allocation13 + $0xa8] sm:$0xff]
    %v523 = vld [vmem:[#allocation13 + $0xb0] sm:$0xff]
    %v524 = vld [vmem:[#allocation13 + $0xb8] sm:$0xff]
    %v525 = vld [vmem:[#allocation13 + $0xc0] sm:$0xff]
    %v526 = vld [vmem:[#allocation13 + $0xc8] sm:$0xff]
    %v527 = vld [vmem:[#allocation13 + $0xd0] sm:$0xff]
    %v528 = vld [vmem:[#allocation13 + $0xd8] sm:$0xff]
    %v529 = vld [vmem:[#allocation13 + $0xe0] sm:$0xff]
    %v530 = vld [vmem:[#allocation13 + $0xe8] sm:$0xff]
    %v531 = vld [vmem:[#allocation13 + $0xf0] sm:$0xff]
    %v532 = vld [vmem:[#allocation13 + $0xf8] sm:$0xff]
    %v533 = vld [vmem:[%s8] sm:$0x1]
    %v535 = vperm.slane %v533, 0
    %537 = vmatpush.msra.mxu0 %v516
    %538 = vmatpush.msra.mxu0 %v515
    %539 = vmatpush.msra.mxu0 %v514
    %540 = vmatpush.msra.mxu0 %v513
    %541 = vmatpush.msra.mxu0 %v512
    %542 = vmatpush.msra.mxu0 %v511
    %543 = vmatpush.msra.mxu0 %v510
    %544 = vmatpush.msra.mxu0 %v509
    %545 = vmatpush.msra.mxu0 %v508
    %546 = vmatpush.msra.mxu0 %v507
    %547 = vmatpush.msra.mxu0 %v506
    %548 = vmatpush.msra.mxu0 %v505
    %549 = vmatpush.msra.mxu0 %v504
    %550 = vmatpush.msra.mxu0 %v503
    %551 = vmatpush.msra.mxu0 %v502
    %552 = vmatpush.msra.mxu0 %v501
    %553 = vmatmul.f32.gmra.mxu0 %v499
    %v554 = vpop.f32.mrf.mxu0
    %v555 = vadd.f32 %v535, %v554
    %556 = vdwg.mxu0
    %557 = vmatpush.msra.mxu0 %v532
    %558 = vmatpush.msra.mxu0 %v531
    %559 = vmatpush.msra.mxu0 %v530
    %560 = vmatpush.msra.mxu0 %v529
    %561 = vmatpush.msra.mxu0 %v528
    %562 = vmatpush.msra.mxu0 %v527
    %563 = vmatpush.msra.mxu0 %v526
    %564 = vmatpush.msra.mxu0 %v525
    %565 = vmatpush.msra.mxu0 %v524
    %566 = vmatpush.msra.mxu0 %v523
    %567 = vmatpush.msra.mxu0 %v522
    %568 = vmatpush.msra.mxu0 %v521
    %569 = vmatpush.msra.mxu0 %v520
    %570 = vmatpush.msra.mxu0 %v519
    %571 = vmatpush.msra.mxu0 %v518
    %572 = vmatpush.msra.mxu0 %v517
    %573 = vmatmul.f32.gmra.mxu0 %v500
    %v574 = vpop.f32.mrf.mxu0
    %v575 = vadd.f32 %v555, %v574
    %576 = vdwg.mxu0
    %577 = vst [vmem:[#allocation14] sm:$0xff] %v575
    // Predicated region
    $region66: #{_lambda_.1} parent=1 // pred_check
      _
    $region67: #{_lambda_.1} parent=1 // pred_check_branch
      %579 = sbr.rel (0) target = $region69
    $region68: #{_lambda_.1} parent=1 // pred_region
      %581 = vsyncadd [#allocation4], 0
      %s583 = sshll.u32 [#allocation14], 4
      %s584 = int_to_ptr.vmem [resolvable:$true] %s583
      %s585 = sshll.u32 %s9, 4
      %s586 = int_to_ptr.hbm [resolvable:$true] %s585
      %588 = dma.vmem_to_hbm [thread:$0]  %s584, 128, %s586, [#allocation4]
    $region69: #{_lambda_.1} parent=1 // pred_fallthru
      _
    // Predicated region
    $region70: #{_lambda_.1} parent=1 // pred_check
      _
    $region71: #{_lambda_.1} parent=1 // pred_check_branch
      %590 = sbr.rel (0) target = $region73
    $region72: #{_lambda_.1} parent=1 // pred_region
      %592 = dma.done [#allocation4], 128
    $region73: #{_lambda_.1} parent=1 // pred_fallthru
      _
    %593 = vsyncpa [#allocation3], 1
    %594 = vsyncpa [#allocation6], 1
    %595 = vsyncpa [#allocation9], 1
    %596 = vsyncpa [#allocation12], 1
    %597 = vsyncpa [#allocation4], 1

</llo_original>
